<compile_context>
chip_gen: v6e
topology: v6e:2x2x1
jax: 0.10.0
libtpu: 0.0.40
codegen_flags: <defaults>
</compile_context>

<pallas_src>
import functools

import jax
import jax.numpy as jnp
from jax import lax
from jax.experimental import pallas as pl
from jax.experimental.pallas import tpu as pltpu


def _round_up(x, m):
    return (x + m - 1) // m * m


def fold_bn(gamma, beta, mean, var, eps=1e-5):
    scale = gamma / jnp.sqrt(var + eps)
    bias = beta - mean * scale
    return scale, bias


def _build_tap_masks(H, W, nb):
    """f32 (9, nb*H*W) boundary masks; tap t = (di+1)*3 + (dj+1).

    Built once in the wrapper (no in-kernel mod/div).  The masks also zero
    the lanes that pltpu.roll wraps across image / block boundaries.
    """
    flat = jnp.arange(H * W, dtype=jnp.int32)
    col = flat % W
    row = flat // W
    rows = []
    for di in (-1, 0, 1):
        for dj in (-1, 0, 1):
            m = ((row + di >= 0) & (row + di < H) &
                 (col + dj >= 0) & (col + dj < W))
            rows.append(m.astype(jnp.float32))
    m9 = jnp.stack(rows, axis=0)          # (9, H*W)
    return jnp.tile(m9, (1, nb))          # (9, nb*H*W)


def _make_kernel(W, L, use_res, compute_dtype):
    """L = lanes per block (= nb*H*W); each block holds whole images only."""

    def maybe_cast(v):
        return v if compute_dtype == jnp.float32 else v.astype(compute_dtype)

    def kernel(x_ref, m_ref, w1_ref, b1_ref, wdw_ref, b2_ref, w3_ref, b3_ref,
               o_ref):
        x = x_ref[...]                                       # (Cin_p, L) f32

        # ---- 1x1 expand conv (BN scale folded into w1) + bias + ReLU6 ----
        h = jnp.dot(maybe_cast(w1_ref[...]), maybe_cast(x),
                    preferred_element_type=jnp.float32)
        h = jnp.clip(h + b1_ref[...], 0.0, 6.0)              # (hidden_p, L)

        # ---- 3x3 depthwise conv, stride 1, pad 1 (BN scale folded) + ReLU6 --
        # Each tap is a static lane rotation (XLU slot, overlaps the VALU
        # multiply/adds).  Rotation wraps only at block edges, where the
        # boundary mask for that tap is zero, so no halo is needed.
        masks = m_ref[...]                                   # (9, L) f32
        wdw = wdw_ref[...]                                   # (hidden_p, 9)
        acc = jnp.zeros_like(h)
        t = 0
        for di in (-1, 0, 1):
            for dj in (-1, 0, 1):
                off = di * W + dj
                w_t = wdw[:, t:t + 1]                        # (hidden_p, 1)
                if off == 0:
                    acc = acc + h * w_t                      # center: mask==1
                else:
                    tap = pltpu.roll(h, (-off) % L, 1)       # tap[c,i]=h[c,i+off]
                    acc = acc + (tap * masks[t:t + 1, :]) * w_t
                t += 1
        acc = jnp.clip(acc + b2_ref[...], 0.0, 6.0)          # (hidden_p, L)

        # ---- 1x1 projection conv (BN scale folded) + bias, no activation ----
        y = jnp.dot(maybe_cast(w3_ref[...]), maybe_cast(acc),
                    preferred_element_type=jnp.float32)
        y = y + b3_ref[...]                                  # (Cout_p, L)
        if use_res:
            y = y + x
        o_ref[...] = y                                       # lane-dense store

    return kernel


def prepare_kernel_params(p):
    """Fold BN scales into conv weights; pad channel dims to 8-sublane multiples."""
    hidden, cin = p["w1_oi"].shape
    cout = p["w3_oi"].shape[0]
    hp, cip, cop = _round_up(hidden, 8), _round_up(cin, 8), _round_up(cout, 8)

    w1 = jnp.pad(p["w1_oi"] * p["s1"][:, None],
                 ((0, hp - hidden), (0, cip - cin)))                  # (hp, cip)
    b1 = jnp.pad(p["b1"], (0, hp - hidden)).reshape(hp, 1)
    wdw = (p["wdw_o33"] * p["s2"][:, None, None]).reshape(hidden, 9)  # t=ki*3+kj
    wdw = jnp.pad(wdw, ((0, hp - hidden), (0, 0)))                    # (hp, 9)
    b2 = jnp.pad(p["b2"], (0, hp - hidden)).reshape(hp, 1)
    w3 = jnp.pad(p["w3_oi"] * p["s3"][:, None],
                 ((0, cop - cout), (0, hp - hidden)))                 # (cop, hp)
    b3 = jnp.pad(p["b3"], (0, cop - cout)).reshape(cop, 1)
    return dict(w1=w1, b1=b1, wdw=wdw, b2=b2, w3=w3, b3=b3), cout


@functools.partial(jax.jit, static_argnames=("use_res", "nb", "compute_dtype"))
def _inverted_residual_impl(x_nchw, kp, *, use_res, nb, compute_dtype):
    N, Cin, H, W = x_nchw.shape
    cin_p = kp["w1"].shape[1]
    cout_p = kp["w3"].shape[0]
    assert N % nb == 0
    L = nb * H * W            # lanes per block (multiple of 128 at real sizes)
    NHW = N * H * W

    # Lane-dense layout: (channels, N*H*W); flattened spatial on the lane axis.
    x2d = jnp.transpose(x_nchw, (1, 0, 2, 3)).reshape(Cin, NHW)
    x2d = jnp.pad(x2d, ((0, cin_p - Cin), (0, 0)))            # (cin_p, NHW)

    masks = _build_tap_masks(H, W, nb)                        # (9, L)

    const2 = lambda i: (0, 0)                                 # resident operands
    in_specs = [
        pl.BlockSpec((cin_p, L), lambda i: (0, i)),           # x  (per-block)
        pl.BlockSpec(masks.shape, const2),                    # tap masks
        pl.BlockSpec(kp["w1"].shape, const2),
        pl.BlockSpec(kp["b1"].shape, const2),
        pl.BlockSpec(kp["wdw"].shape, const2),
        pl.BlockSpec(kp["b2"].shape, const2),
        pl.BlockSpec(kp["w3"].shape, const2),
        pl.BlockSpec(kp["b3"].shape, const2),
    ]
    out_specs = pl.BlockSpec((cout_p, L), lambda i: (0, i))

    # Reuse x's HBM buffer for the output on the residual path.
    alias = {0: 0} if (use_res and cin_p == cout_p) else {}

    y2d = pl.pallas_call(
        _make_kernel(W, L, use_res, compute_dtype),
        out_shape=jax.ShapeDtypeStruct((cout_p, NHW), jnp.float32),
        grid=(N // nb,),
        in_specs=in_specs,
        out_specs=out_specs,
        input_output_aliases=alias,
        compiler_params=pltpu.CompilerParams(
            dimension_semantics=("parallel",),      # megacore on v7x
            vmem_limit_bytes=32 * 1024 * 1024),
    )(x2d, masks, kp["w1"], kp["b1"], kp["wdw"], kp["b2"], kp["w3"], kp["b3"])
    return y2d


def inverted_residual_pallas(x_nchw, params, use_res, *, nb=1,
                             compute_dtype=jnp.float32):
    """x_nchw: (N, Cin, H, W) f32; params in PyTorch layout + folded BN
    (w1_oi, s1, b1, wdw_o33, s2, b2, w3_oi, s3, b3). Returns (N, Cout, H, W).

    compute_dtype=jnp.bfloat16 casts the 1x1 matmul operands for the v6e/v7x
    MXU (f32 accumulation kept); the demo uses f32 for the 1e-4 check.
    """
    kp, cout = prepare_kernel_params(params)
    N, _, H, W = x_nchw.shape
    y2d = _inverted_residual_impl(x_nchw, kp, use_res=use_res, nb=nb,
                                  compute_dtype=compute_dtype)
    return jnp.transpose(y2d[:cout].reshape(cout, N, H, W), (1, 0, 2, 3))


def ref_forward_nchw(x, p, use_res):
    """Pure-JAX reference following the PyTorch NCHW module exactly."""
    relu6 = lambda v: jnp.clip(v, 0.0, 6.0)
    h = jnp.einsum("nchw,kc->nkhw", x, p["w1_oi"])
    h = relu6(h * p["s1"][None, :, None, None] + p["b1"][None, :, None, None])
    hidden = p["wdw_o33"].shape[0]
    dw = lax.conv_general_dilated(
        h, p["wdw_o33"].reshape(hidden, 1, 3, 3), window_strides=(1, 1),
        padding="SAME", feature_group_count=hidden,
        dimension_numbers=("NCHW", "OIHW", "NCHW"))
    dw = relu6(dw * p["s2"][None, :, None, None] + p["b2"][None, :, None, None])
    y = jnp.einsum("nchw,kc->nkhw", dw, p["w3_oi"])
    y = y * p["s3"][None, :, None, None] + p["b3"][None, :, None, None]
    return x + y if use_res else y


if __name__ == "__main__":
    # Small-but-representative module config: inp == oup, stride 1 -> residual.
    N, H, W = 2, 16, 16
    inp, oup, stride, expand_ratio = 4, 4, 1, 6
    hidden = int(round(inp * expand_ratio))      # 24
    use_res = (stride == 1) and (inp == oup)
    assert stride == 1                           # demo covers the stride-1 path

    key = jax.random.PRNGKey(0)
    ks = jax.random.split(key, 16)

    # Conv weights in PyTorch layouts (no bias in the convs).
    w1_oi = 0.2 * jax.random.normal(ks[0], (hidden, inp), jnp.float32)     # 1x1 expand (O, I)
    wdw_o33 = 0.2 * jax.random.normal(ks[1], (hidden, 3, 3), jnp.float32)  # depthwise (O,1,3,3) squeezed
    w3_oi = 0.2 * jax.random.normal(ks[2], (oup, hidden), jnp.float32)     # 1x1 project (O, I)

    # Inference BatchNorm params, folded to (scale, bias).
    def bn(kg, kb, km, kv, c):
        gamma = 0.5 + jax.random.uniform(kg, (c,), jnp.float32)
        beta = 0.1 * jax.random.normal(kb, (c,), jnp.float32)
        mean = 0.1 * jax.random.normal(km, (c,), jnp.float32)
        var = 0.5 + jax.random.uniform(kv, (c,), jnp.float32)
        return fold_bn(gamma, beta, mean, var)

    s1, b1 = bn(ks[3], ks[4], ks[5], ks[6], hidden)
    s2, b2 = bn(ks[7], ks[8], ks[9], ks[10], hidden)
    s3, b3 = bn(ks[11], ks[12], ks[13], ks[14], oup)

    params = dict(w1_oi=w1_oi, s1=s1, b1=b1,
                  wdw_o33=wdw_o33, s2=s2, b2=b2,
                  w3_oi=w3_oi, s3=s3, b3=b3)

    # Input in PyTorch NCHW convention.
    x_nchw = jax.random.normal(ks[15], (N, inp, H, W), jnp.float32)

    out = inverted_residual_pallas(x_nchw, params, use_res, nb=1,
                                   compute_dtype=jnp.float32)
    out = jax.block_until_ready(out)

    ref = ref_forward_nchw(x_nchw, params, use_res)
    assert out.shape == ref.shape == (N, oup, H, W)
    max_err = float(jnp.max(jnp.abs(out - ref)))
    assert jnp.allclose(out, ref, atol=1e-4, rtol=1e-4), max_err

    print("KERNEL_OK")
</pallas_src>

<mosaic_0001>
module attributes {stable_mosaic.version = 11 : i64} {
  func.func @kernel(%arg0: i32, %arg1: memref<8x256xf32, #tpu.memory_space<vmem>>, %arg2: memref<9x256xf32, #tpu.memory_space<vmem>>, %arg3: memref<24x8xf32, #tpu.memory_space<vmem>>, %arg4: memref<24x1xf32, #tpu.memory_space<vmem>>, %arg5: memref<24x9xf32, #tpu.memory_space<vmem>>, %arg6: memref<24x1xf32, #tpu.memory_space<vmem>>, %arg7: memref<8x24xf32, #tpu.memory_space<vmem>>, %arg8: memref<8x1xf32, #tpu.memory_space<vmem>>, %arg9: memref<8x256xf32, #tpu.memory_space<vmem>>) attributes {dimension_semantics = [#tpu.dimension_semantics<parallel>], iteration_bounds = array<i64: 2>, scalar_prefetch = 0 : i64, scratch_operands = 0 : i64, tpu.core_type = #tpu.core_type<tc>, window_params = [{transform_indices = @transform_0, window_bounds = array<i64: 8, 256>}, {pipeline_mode = #tpu.pipeline_mode<synchronous>, transform_indices = @transform_1, window_bounds = array<i64: 9, 256>}, {pipeline_mode = #tpu.pipeline_mode<synchronous>, transform_indices = @transform_2, window_bounds = array<i64: 24, 8>}, {pipeline_mode = #tpu.pipeline_mode<synchronous>, transform_indices = @transform_3, window_bounds = array<i64: 24, 1>}, {pipeline_mode = #tpu.pipeline_mode<synchronous>, transform_indices = @transform_4, window_bounds = array<i64: 24, 9>}, {pipeline_mode = #tpu.pipeline_mode<synchronous>, transform_indices = @transform_5, window_bounds = array<i64: 24, 1>}, {pipeline_mode = #tpu.pipeline_mode<synchronous>, transform_indices = @transform_6, window_bounds = array<i64: 8, 24>}, {pipeline_mode = #tpu.pipeline_mode<synchronous>, transform_indices = @transform_7, window_bounds = array<i64: 8, 1>}, {transform_indices = @transform_8, window_bounds = array<i64: 8, 256>}]} {
    %c0 = arith.constant 0 : index
    %c0_0 = arith.constant 0 : index
    %0 = vector.load %arg1[%c0, %c0_0] : memref<8x256xf32, #tpu.memory_space<vmem>>, vector<8x256xf32>
    %c0_1 = arith.constant 0 : index
    %c0_2 = arith.constant 0 : index
    %1 = vector.load %arg3[%c0_1, %c0_2] : memref<24x8xf32, #tpu.memory_space<vmem>>, vector<24x8xf32>
    %cst = arith.constant dense<0.000000e+00> : vector<24x256xf32>
    %2 = tpu.matmul %1, %0, %cst {dimension_numbers = #tpu.dot_dimension_numbers<[1], [0], [0], [1], [0, 0, 1, 1], [], []>} : vector<24x8xf32>, vector<8x256xf32>, vector<24x256xf32> -> vector<24x256xf32>
    %c0_3 = arith.constant 0 : index
    %c0_4 = arith.constant 0 : index
    %3 = vector.load %arg4[%c0_3, %c0_4] : memref<24x1xf32, #tpu.memory_space<vmem>>, vector<24x1xf32>
    %4 = vector.broadcast %3 : vector<24x1xf32> to vector<24x256xf32>
    %5 = arith.addf %2, %4 : vector<24x256xf32>
    %cst_5 = arith.constant 0.000000e+00 : f32
    %cst_6 = arith.constant 6.000000e+00 : f32
    %6 = vector.broadcast %cst_5 : f32 to vector<24x256xf32>
    %7 = arith.maximumf %6, %5 : vector<24x256xf32>
    %8 = vector.broadcast %cst_6 : f32 to vector<24x256xf32>
    %9 = arith.minimumf %8, %7 : vector<24x256xf32>
    %c0_7 = arith.constant 0 : index
    %c0_8 = arith.constant 0 : index
    %10 = vector.load %arg2[%c0_7, %c0_8] : memref<9x256xf32, #tpu.memory_space<vmem>>, vector<9x256xf32>
    %c0_9 = arith.constant 0 : index
    %c0_10 = arith.constant 0 : index
    %11 = vector.load %arg5[%c0_9, %c0_10] : memref<24x9xf32, #tpu.memory_space<vmem>>, vector<24x9xf32>
    %cst_11 = arith.constant 0.000000e+00 : f32
    %12 = vector.broadcast %cst_11 : f32 to vector<24x256xf32>
    %13 = vector.extract_strided_slice %11 {offsets = [0, 0], sizes = [24, 1], strides = [1, 1]} : vector<24x9xf32> to vector<24x1xf32>
    %c17_i32 = arith.constant 17 : i32
    %14 = tpu.dynamic_rotate %9 by %c17_i32 dim 1 : vector<24x256xf32>, i32 -> vector<24x256xf32>
    %15 = vector.extract_strided_slice %10 {offsets = [0, 0], sizes = [1, 256], strides = [1, 1]} : vector<9x256xf32> to vector<1x256xf32>
    %16 = vector.broadcast %15 : vector<1x256xf32> to vector<24x256xf32>
    %17 = arith.mulf %14, %16 : vector<24x256xf32>
    %18 = vector.broadcast %13 : vector<24x1xf32> to vector<24x256xf32>
    %19 = arith.mulf %17, %18 : vector<24x256xf32>
    %20 = arith.addf %12, %19 : vector<24x256xf32>
    %21 = vector.extract_strided_slice %11 {offsets = [0, 1], sizes = [24, 1], strides = [1, 1]} : vector<24x9xf32> to vector<24x1xf32>
    %c16_i32 = arith.constant 16 : i32
    %22 = tpu.dynamic_rotate %9 by %c16_i32 dim 1 : vector<24x256xf32>, i32 -> vector<24x256xf32>
    %23 = vector.extract_strided_slice %10 {offsets = [1, 0], sizes = [1, 256], strides = [1, 1]} : vector<9x256xf32> to vector<1x256xf32>
    %24 = vector.broadcast %23 : vector<1x256xf32> to vector<24x256xf32>
    %25 = arith.mulf %22, %24 : vector<24x256xf32>
    %26 = vector.broadcast %21 : vector<24x1xf32> to vector<24x256xf32>
    %27 = arith.mulf %25, %26 : vector<24x256xf32>
    %28 = arith.addf %20, %27 : vector<24x256xf32>
    %29 = vector.extract_strided_slice %11 {offsets = [0, 2], sizes = [24, 1], strides = [1, 1]} : vector<24x9xf32> to vector<24x1xf32>
    %c15_i32 = arith.constant 15 : i32
    %30 = tpu.dynamic_rotate %9 by %c15_i32 dim 1 : vector<24x256xf32>, i32 -> vector<24x256xf32>
    %31 = vector.extract_strided_slice %10 {offsets = [2, 0], sizes = [1, 256], strides = [1, 1]} : vector<9x256xf32> to vector<1x256xf32>
    %32 = vector.broadcast %31 : vector<1x256xf32> to vector<24x256xf32>
    %33 = arith.mulf %30, %32 : vector<24x256xf32>
    %34 = vector.broadcast %29 : vector<24x1xf32> to vector<24x256xf32>
    %35 = arith.mulf %33, %34 : vector<24x256xf32>
    %36 = arith.addf %28, %35 : vector<24x256xf32>
    %37 = vector.extract_strided_slice %11 {offsets = [0, 3], sizes = [24, 1], strides = [1, 1]} : vector<24x9xf32> to vector<24x1xf32>
    %c1_i32 = arith.constant 1 : i32
    %38 = tpu.dynamic_rotate %9 by %c1_i32 dim 1 : vector<24x256xf32>, i32 -> vector<24x256xf32>
    %39 = vector.extract_strided_slice %10 {offsets = [3, 0], sizes = [1, 256], strides = [1, 1]} : vector<9x256xf32> to vector<1x256xf32>
    %40 = vector.broadcast %39 : vector<1x256xf32> to vector<24x256xf32>
    %41 = arith.mulf %38, %40 : vector<24x256xf32>
    %42 = vector.broadcast %37 : vector<24x1xf32> to vector<24x256xf32>
    %43 = arith.mulf %41, %42 : vector<24x256xf32>
    %44 = arith.addf %36, %43 : vector<24x256xf32>
    %45 = vector.extract_strided_slice %11 {offsets = [0, 4], sizes = [24, 1], strides = [1, 1]} : vector<24x9xf32> to vector<24x1xf32>
    %46 = vector.broadcast %45 : vector<24x1xf32> to vector<24x256xf32>
    %47 = arith.mulf %9, %46 : vector<24x256xf32>
    %48 = arith.addf %44, %47 : vector<24x256xf32>
    %49 = vector.extract_strided_slice %11 {offsets = [0, 5], sizes = [24, 1], strides = [1, 1]} : vector<24x9xf32> to vector<24x1xf32>
    %c255_i32 = arith.constant 255 : i32
    %50 = tpu.dynamic_rotate %9 by %c255_i32 dim 1 : vector<24x256xf32>, i32 -> vector<24x256xf32>
    %51 = vector.extract_strided_slice %10 {offsets = [5, 0], sizes = [1, 256], strides = [1, 1]} : vector<9x256xf32> to vector<1x256xf32>
    %52 = vector.broadcast %51 : vector<1x256xf32> to vector<24x256xf32>
    %53 = arith.mulf %50, %52 : vector<24x256xf32>
    %54 = vector.broadcast %49 : vector<24x1xf32> to vector<24x256xf32>
    %55 = arith.mulf %53, %54 : vector<24x256xf32>
    %56 = arith.addf %48, %55 : vector<24x256xf32>
    %57 = vector.extract_strided_slice %11 {offsets = [0, 6], sizes = [24, 1], strides = [1, 1]} : vector<24x9xf32> to vector<24x1xf32>
    %c241_i32 = arith.constant 241 : i32
    %58 = tpu.dynamic_rotate %9 by %c241_i32 dim 1 : vector<24x256xf32>, i32 -> vector<24x256xf32>
    %59 = vector.extract_strided_slice %10 {offsets = [6, 0], sizes = [1, 256], strides = [1, 1]} : vector<9x256xf32> to vector<1x256xf32>
    %60 = vector.broadcast %59 : vector<1x256xf32> to vector<24x256xf32>
    %61 = arith.mulf %58, %60 : vector<24x256xf32>
    %62 = vector.broadcast %57 : vector<24x1xf32> to vector<24x256xf32>
    %63 = arith.mulf %61, %62 : vector<24x256xf32>
    %64 = arith.addf %56, %63 : vector<24x256xf32>
    %65 = vector.extract_strided_slice %11 {offsets = [0, 7], sizes = [24, 1], strides = [1, 1]} : vector<24x9xf32> to vector<24x1xf32>
    %c240_i32 = arith.constant 240 : i32
    %66 = tpu.dynamic_rotate %9 by %c240_i32 dim 1 : vector<24x256xf32>, i32 -> vector<24x256xf32>
    %67 = vector.extract_strided_slice %10 {offsets = [7, 0], sizes = [1, 256], strides = [1, 1]} : vector<9x256xf32> to vector<1x256xf32>
    %68 = vector.broadcast %67 : vector<1x256xf32> to vector<24x256xf32>
    %69 = arith.mulf %66, %68 : vector<24x256xf32>
    %70 = vector.broadcast %65 : vector<24x1xf32> to vector<24x256xf32>
    %71 = arith.mulf %69, %70 : vector<24x256xf32>
    %72 = arith.addf %64, %71 : vector<24x256xf32>
    %73 = vector.extract_strided_slice %11 {offsets = [0, 8], sizes = [24, 1], strides = [1, 1]} : vector<24x9xf32> to vector<24x1xf32>
    %c239_i32 = arith.constant 239 : i32
    %74 = tpu.dynamic_rotate %9 by %c239_i32 dim 1 : vector<24x256xf32>, i32 -> vector<24x256xf32>
    %75 = vector.extract_strided_slice %10 {offsets = [8, 0], sizes = [1, 256], strides = [1, 1]} : vector<9x256xf32> to vector<1x256xf32>
    %76 = vector.broadcast %75 : vector<1x256xf32> to vector<24x256xf32>
    %77 = arith.mulf %74, %76 : vector<24x256xf32>
    %78 = vector.broadcast %73 : vector<24x1xf32> to vector<24x256xf32>
    %79 = arith.mulf %77, %78 : vector<24x256xf32>
    %80 = arith.addf %72, %79 : vector<24x256xf32>
    %c0_12 = arith.constant 0 : index
    %c0_13 = arith.constant 0 : index
    %81 = vector.load %arg6[%c0_12, %c0_13] : memref<24x1xf32, #tpu.memory_space<vmem>>, vector<24x1xf32>
    %82 = vector.broadcast %81 : vector<24x1xf32> to vector<24x256xf32>
    %83 = arith.addf %80, %82 : vector<24x256xf32>
    %cst_14 = arith.constant 0.000000e+00 : f32
    %cst_15 = arith.constant 6.000000e+00 : f32
    %84 = vector.broadcast %cst_14 : f32 to vector<24x256xf32>
    %85 = arith.maximumf %84, %83 : vector<24x256xf32>
    %86 = vector.broadcast %cst_15 : f32 to vector<24x256xf32>
    %87 = arith.minimumf %86, %85 : vector<24x256xf32>
    %c0_16 = arith.constant 0 : index
    %c0_17 = arith.constant 0 : index
    %88 = vector.load %arg7[%c0_16, %c0_17] : memref<8x24xf32, #tpu.memory_space<vmem>>, vector<8x24xf32>
    %cst_18 = arith.constant dense<0.000000e+00> : vector<8x256xf32>
    %89 = tpu.matmul %88, %87, %cst_18 {dimension_numbers = #tpu.dot_dimension_numbers<[1], [0], [0], [1], [0, 0, 1, 1], [], []>} : vector<8x24xf32>, vector<24x256xf32>, vector<8x256xf32> -> vector<8x256xf32>
    %c0_19 = arith.constant 0 : index
    %c0_20 = arith.constant 0 : index
    %90 = vector.load %arg8[%c0_19, %c0_20] : memref<8x1xf32, #tpu.memory_space<vmem>>, vector<8x1xf32>
    %91 = vector.broadcast %90 : vector<8x1xf32> to vector<8x256xf32>
    %92 = arith.addf %89, %91 : vector<8x256xf32>
    %93 = arith.addf %92, %0 : vector<8x256xf32>
    %c0_21 = arith.constant 0 : index
    %c0_22 = arith.constant 0 : index
    %94 = vector.load %arg9[%c0_21, %c0_22] : memref<8x256xf32, #tpu.memory_space<vmem>>, vector<8x256xf32>
    tpu.vector_store %arg9[%c0_21, %c0_22], %93 {strides = array<i32>} : memref<8x256xf32, #tpu.memory_space<vmem>>, vector<8x256xf32>,
    return
  }
  func.func @transform_0(%arg0: i32) -> (i32, i32) {
    %c0_i32 = arith.constant 0 : i32
    %c0_i32_0 = arith.constant 0 : i32
    return %c0_i32, %arg0 : i32, i32
  }
  func.func @transform_1(%arg0: i32) -> (i32, i32) {
    %c0_i32 = arith.constant 0 : i32
    %c0_i32_0 = arith.constant 0 : i32
    %c0_i32_1 = arith.constant 0 : i32
    return %c0_i32, %c0_i32_0 : i32, i32
  }
  func.func @transform_2(%arg0: i32) -> (i32, i32) {
    %c0_i32 = arith.constant 0 : i32
    %c0_i32_0 = arith.constant 0 : i32
    %c0_i32_1 = arith.constant 0 : i32
    return %c0_i32, %c0_i32_0 : i32, i32
  }
  func.func @transform_3(%arg0: i32) -> (i32, i32) {
    %c0_i32 = arith.constant 0 : i32
    %c0_i32_0 = arith.constant 0 : i32
    %c0_i32_1 = arith.constant 0 : i32
    return %c0_i32, %c0_i32_0 : i32, i32
  }
  func.func @transform_4(%arg0: i32) -> (i32, i32) {
    %c0_i32 = arith.constant 0 : i32
    %c0_i32_0 = arith.constant 0 : i32
    %c0_i32_1 = arith.constant 0 : i32
    return %c0_i32, %c0_i32_0 : i32, i32
  }
  func.func @transform_5(%arg0: i32) -> (i32, i32) {
    %c0_i32 = arith.constant 0 : i32
    %c0_i32_0 = arith.constant 0 : i32
    %c0_i32_1 = arith.constant 0 : i32
    return %c0_i32, %c0_i32_0 : i32, i32
  }
  func.func @transform_6(%arg0: i32) -> (i32, i32) {
    %c0_i32 = arith.constant 0 : i32
    %c0_i32_0 = arith.constant 0 : i32
    %c0_i32_1 = arith.constant 0 : i32
    return %c0_i32, %c0_i32_0 : i32, i32
  }
  func.func @transform_7(%arg0: i32) -> (i32, i32) {
    %c0_i32 = arith.constant 0 : i32
    %c0_i32_0 = arith.constant 0 : i32
    %c0_i32_1 = arith.constant 0 : i32
    return %c0_i32, %c0_i32_0 : i32, i32
  }
  func.func @transform_8(%arg0: i32) -> (i32, i32) {
    %c0_i32 = arith.constant 0 : i32
    %c0_i32_0 = arith.constant 0 : i32
    return %c0_i32, %arg0 : i32, i32
  }
}

</mosaic_0001>

<llo_original>
// kernel: _inverted_residual_impl.1
$region0: #{_inverted_residual_impl.1}
  #allocation0 [shape = 'u32[]', space=smem, size = 0x4, offset = 0x4, fixed_abs, tag = 'smem constant byte address 0x4 - core index']
  #allocation1 [shape = 'u32[144,128]{1,0:T(1,128)}', space=vmem, size = 0x12000, scoped, tag = 'internal scratch']
  %s0 = inlined_call_operand.hbm [shape: f32[8,512], index: 0, kind: input, shape index: {}, may-alias: {0,8}]
  %s1 = inlined_call_operand.vmem [shape: f32[9,256], index: 1, kind: input, shape index: {}]
  %s2 = inlined_call_operand.vmem [shape: f32[24,8], index: 2, kind: input, shape index: {}]
  %s3 = inlined_call_operand.vmem [shape: f32[24,1], index: 3, kind: input, shape index: {}]
  %s4 = inlined_call_operand.vmem [shape: f32[24,9], index: 4, kind: input, shape index: {}]
  %s5 = inlined_call_operand.vmem [shape: f32[24,1], index: 5, kind: input, shape index: {}]
  %s6 = inlined_call_operand.vmem [shape: f32[8,24], index: 6, kind: input, shape index: {}]
  %s7 = inlined_call_operand.vmem [shape: f32[8,1], index: 7, kind: input, shape index: {}]
  %s8 = inlined_call_operand.hbm [shape: f32[8,512], index: 8, kind: output, shape index: {}, may-alias: {0,8}]
  %s9 = sld [smem:[#allocation0]]
  $region69: #{_inverted_residual_impl.1} parent=0
    _
  %s11 = ssub.s32 1, %s9
  %s12 = scalar_select 0, %s11, %s9
  $region1: #{_inverted_residual_impl.1} parent=0
    #allocation2 [shape = 'u8[16384]{0}', space=vmem, size = 0x4000, scoped, tag = 'input window, operand 0']
    #allocation3 [shape = 's32[2]{0}', space=sflag, size = 0x8, scoped, tag = 'scoped memory for _inverted_residual_impl.1']
    #allocation4 [shape = 's32[2]{0}', space=sflag, size = 0x8, scoped, tag = 'scoped memory for _inverted_residual_impl.1']
    #allocation5 [shape = 'u8[16384]{0}', space=vmem, size = 0x4000, scoped, tag = 'output window, operand 0']
    %13 = vsyncpa [#allocation3], 0
    %s14 = scalar_lea.sflag [#allocation3], 1
    %15 = vsyncpa %s14, 0
    %16 = vsyncpa [#allocation4], 0
    %s17 = scalar_lea.sflag [#allocation4], 1
    %18 = vsyncpa %s17, 0
    loop: start=0, step=1, limit=4
    $region2: #{_inverted_residual_impl.1} parent=1 // loop_pre_header
      _
    $region3: #{_inverted_residual_impl.1} parent=1 // loop_header
      %s20 = sphi 0, %s24
      %p21 = scmp.ge.s32.totalorder %s20, 4
      %s30 = sphi 0, %s32
      %s33 = sphi 0, %s30
      %s34 = sphi 0, %s33
      %s50 = sphi 0, %s34
      %s54 = sphi 0, %s54
      %s56 = sphi 0, %s54
      %s57 = sphi 0, %s56
      %s71 = sphi 0, %s57
      %s75 = sphi 0, %s75
      %s77 = sphi 0, %s75
      %s78 = sphi 0, %s77
      %s92 = sphi 0, %s78
      %s96 = sphi 0, %s96
      %s98 = sphi 0, %s96
      %s99 = sphi 0, %s98
      %s113 = sphi 0, %s99
      %s117 = sphi 0, %s117
      %s119 = sphi 0, %s117
      %s120 = sphi 0, %s119
      %s134 = sphi 0, %s120
      %s138 = sphi 0, %s138
      %s140 = sphi 0, %s138
      %s141 = sphi 0, %s140
      %s155 = sphi 0, %s141
      %s159 = sphi 0, %s159
      %s161 = sphi 0, %s159
      %s162 = sphi 0, %s161
      %s176 = sphi 0, %s162
      %s180 = sphi 0, %s180
      %s182 = sphi 0, %s180
      %s183 = sphi 0, %s182
      %s197 = sphi 0, %s183
      %s203 = sphi 0, %s205
      %s206 = sphi 0, %s203
      %s207 = sphi 0, %s206
      %s223 = sphi 0, %s207
    $region4: #{_inverted_residual_impl.1} parent=1 // loop_header_branch
      %23 = sbr.rel (%p21) target = $region8
    $region5: #{_inverted_residual_impl.1} parent=1 // loop_body
      %s25 = ssub.s32 %s20, 1
      %s26 = ssub.s32 %s20, 2
      %s27 = sadd.s32 %s20, 1
      %s28 = ssub.s32 %s20, %s27
      %p29 = scmp.eq.s32.totalorder %s28, 0
      %s31 = sadd.s32 %s30, 1
      %s32 = scalar_select %p29, %s30, %s31
      %p35 = pneg %p29
      %p36 = scmp.eq.s32.totalorder %s20, 1
      %p37 = por %p35, %p36
      %p38 = scmp.ne.s32.totalorder %s30, %s33
      %p39 = scmp.eq.s32.totalorder %s20, 0
      %p40 = por %p38, %p39
      %p41 = scmp.ne.s32.totalorder %s30, %s33
      %p42 = scmp.eq.s32.totalorder %s25, 1
      %p43 = por %p41, %p42
      %p44 = scmp.ne.s32.totalorder %s33, %s34
      %p45 = scmp.eq.s32.totalorder %s25, 0
      %p46 = por %p44, %p45
      %p47 = scmp.ne.s32.totalorder %s33, %s34
      %p48 = scmp.eq.s32.totalorder %s26, 1
      %p49 = por %p47, %p48
      %p51 = scmp.ne.s32.totalorder %s34, %s50
      %p52 = scmp.eq.s32.totalorder %s26, 0
      %p53 = por %p51, %p52
      %s55 = sadd.s32 %s54, 1
      %p58 = scmp.eq.s32.totalorder %s20, 1
      %p59 = scmp.ne.s32.totalorder %s54, %s56
      %p60 = scmp.eq.s32.totalorder %s20, 0
      %p61 = por %p59, %p60
      %p62 = scmp.ne.s32.totalorder %s54, %s56
      %p63 = scmp.eq.s32.totalorder %s25, 1
      %p64 = por %p62, %p63
      %p65 = scmp.ne.s32.totalorder %s56, %s57
      %p66 = scmp.eq.s32.totalorder %s25, 0
      %p67 = por %p65, %p66
      %p68 = scmp.ne.s32.totalorder %s56, %s57
      %p69 = scmp.eq.s32.totalorder %s26, 1
      %p70 = por %p68, %p69
      %p72 = scmp.ne.s32.totalorder %s57, %s71
      %p73 = scmp.eq.s32.totalorder %s26, 0
      %p74 = por %p72, %p73
      %s76 = sadd.s32 %s75, 1
      %p79 = scmp.eq.s32.totalorder %s20, 1
      %p80 = scmp.ne.s32.totalorder %s75, %s77
      %p81 = scmp.eq.s32.totalorder %s20, 0
      %p82 = por %p80, %p81
      %p83 = scmp.ne.s32.totalorder %s75, %s77
      %p84 = scmp.eq.s32.totalorder %s25, 1
      %p85 = por %p83, %p84
      %p86 = scmp.ne.s32.totalorder %s77, %s78
      %p87 = scmp.eq.s32.totalorder %s25, 0
      %p88 = por %p86, %p87
      %p89 = scmp.ne.s32.totalorder %s77, %s78
      %p90 = scmp.eq.s32.totalorder %s26, 1
      %p91 = por %p89, %p90
      %p93 = scmp.ne.s32.totalorder %s78, %s92
      %p94 = scmp.eq.s32.totalorder %s26, 0
      %p95 = por %p93, %p94
      %s97 = sadd.s32 %s96, 1
      %p100 = scmp.eq.s32.totalorder %s20, 1
      %p101 = scmp.ne.s32.totalorder %s96, %s98
      %p102 = scmp.eq.s32.totalorder %s20, 0
      %p103 = por %p101, %p102
      %p104 = scmp.ne.s32.totalorder %s96, %s98
      %p105 = scmp.eq.s32.totalorder %s25, 1
      %p106 = por %p104, %p105
      %p107 = scmp.ne.s32.totalorder %s98, %s99
      %p108 = scmp.eq.s32.totalorder %s25, 0
      %p109 = por %p107, %p108
      %p110 = scmp.ne.s32.totalorder %s98, %s99
      %p111 = scmp.eq.s32.totalorder %s26, 1
      %p112 = por %p110, %p111
      %p114 = scmp.ne.s32.totalorder %s99, %s113
      %p115 = scmp.eq.s32.totalorder %s26, 0
      %p116 = por %p114, %p115
      %s118 = sadd.s32 %s117, 1
      %p121 = scmp.eq.s32.totalorder %s20, 1
      %p122 = scmp.ne.s32.totalorder %s117, %s119
      %p123 = scmp.eq.s32.totalorder %s20, 0
      %p124 = por %p122, %p123
      %p125 = scmp.ne.s32.totalorder %s117, %s119
      %p126 = scmp.eq.s32.totalorder %s25, 1
      %p127 = por %p125, %p126
      %p128 = scmp.ne.s32.totalorder %s119, %s120
      %p129 = scmp.eq.s32.totalorder %s25, 0
      %p130 = por %p128, %p129
      %p131 = scmp.ne.s32.totalorder %s119, %s120
      %p132 = scmp.eq.s32.totalorder %s26, 1
      %p133 = por %p131, %p132
      %p135 = scmp.ne.s32.totalorder %s120, %s134
      %p136 = scmp.eq.s32.totalorder %s26, 0
      %p137 = por %p135, %p136
      %s139 = sadd.s32 %s138, 1
      %p142 = scmp.eq.s32.totalorder %s20, 1
      %p143 = scmp.ne.s32.totalorder %s138, %s140
      %p144 = scmp.eq.s32.totalorder %s20, 0
      %p145 = por %p143, %p144
      %p146 = scmp.ne.s32.totalorder %s138, %s140
      %p147 = scmp.eq.s32.totalorder %s25, 1
      %p148 = por %p146, %p147
      %p149 = scmp.ne.s32.totalorder %s140, %s141
      %p150 = scmp.eq.s32.totalorder %s25, 0
      %p151 = por %p149, %p150
      %p152 = scmp.ne.s32.totalorder %s140, %s141
      %p153 = scmp.eq.s32.totalorder %s26, 1
      %p154 = por %p152, %p153
      %p156 = scmp.ne.s32.totalorder %s141, %s155
      %p157 = scmp.eq.s32.totalorder %s26, 0
      %p158 = por %p156, %p157
      %s160 = sadd.s32 %s159, 1
      %p163 = scmp.eq.s32.totalorder %s20, 1
      %p164 = scmp.ne.s32.totalorder %s159, %s161
      %p165 = scmp.eq.s32.totalorder %s20, 0
      %p166 = por %p164, %p165
      %p167 = scmp.ne.s32.totalorder %s159, %s161
      %p168 = scmp.eq.s32.totalorder %s25, 1
      %p169 = por %p167, %p168
      %p170 = scmp.ne.s32.totalorder %s161, %s162
      %p171 = scmp.eq.s32.totalorder %s25, 0
      %p172 = por %p170, %p171
      %p173 = scmp.ne.s32.totalorder %s161, %s162
      %p174 = scmp.eq.s32.totalorder %s26, 1
      %p175 = por %p173, %p174
      %p177 = scmp.ne.s32.totalorder %s162, %s176
      %p178 = scmp.eq.s32.totalorder %s26, 0
      %p179 = por %p177, %p178
      %s181 = sadd.s32 %s180, 1
      %p184 = scmp.eq.s32.totalorder %s20, 1
      %p185 = scmp.ne.s32.totalorder %s180, %s182
      %p186 = scmp.eq.s32.totalorder %s20, 0
      %p187 = por %p185, %p186
      %p188 = scmp.ne.s32.totalorder %s180, %s182
      %p189 = scmp.eq.s32.totalorder %s25, 1
      %p190 = por %p188, %p189
      %p191 = scmp.ne.s32.totalorder %s182, %s183
      %p192 = scmp.eq.s32.totalorder %s25, 0
      %p193 = por %p191, %p192
      %p194 = scmp.ne.s32.totalorder %s182, %s183
      %p195 = scmp.eq.s32.totalorder %s26, 1
      %p196 = por %p194, %p195
      %p198 = scmp.ne.s32.totalorder %s183, %s197
      %p199 = scmp.eq.s32.totalorder %s26, 0
      %p200 = por %p198, %p199
      %s201 = ssub.s32 %s20, %s27
      %p202 = scmp.eq.s32.totalorder %s201, 0
      %s204 = sadd.s32 %s203, 1
      %s205 = scalar_select %p202, %s203, %s204
      %p208 = pneg %p202
      %p209 = scmp.eq.s32.totalorder %s20, 1
      %p210 = por %p208, %p209
      %p211 = scmp.ne.s32.totalorder %s203, %s206
      %p212 = scmp.eq.s32.totalorder %s20, 0
      %p213 = por %p211, %p212
      %p214 = scmp.ne.s32.totalorder %s203, %s206
      %p215 = scmp.eq.s32.totalorder %s25, 1
      %p216 = por %p214, %p215
      %p217 = scmp.ne.s32.totalorder %s206, %s207
      %p218 = scmp.eq.s32.totalorder %s25, 0
      %p219 = por %p217, %p218
      %p220 = scmp.ne.s32.totalorder %s206, %s207
      %p221 = scmp.eq.s32.totalorder %s26, 1
      %p222 = por %p220, %p221
      %p224 = scmp.ne.s32.totalorder %s207, %s223
      %p225 = scmp.eq.s32.totalorder %s26, 0
      %p226 = por %p224, %p225
      %p227 = scmp.le.s32.totalorder 1, %s20
      %p228 = scmp.lt.s32.totalorder %s20, 3
      %p229 = pnand %p227, %p228
      %p230 = pneg %p229
      // Predicated region
      $region9: #{_inverted_residual_impl.1} parent=5 // pred_check
        _
      $region10: #{_inverted_residual_impl.1} parent=5 // pred_check_branch
        %232 = sbr.rel (%p229) target = $region12
      $region11: #{_inverted_residual_impl.1} parent=5 // pred_region
        %s233 = ssub.s32 %s20, 1
        // Predicated region
        $region13: #{_inverted_residual_impl.1} parent=11 // pred_check
          %p234 = pneg %p67
        $region14: #{_inverted_residual_impl.1} parent=11 // pred_check_branch
          %236 = sbr.rel (%p234) target = $region16
        $region15: #{_inverted_residual_impl.1} parent=11 // pred_region
          _
        $region16: #{_inverted_residual_impl.1} parent=11 // pred_fallthru
          _
        // Predicated region
        $region17: #{_inverted_residual_impl.1} parent=11 // pred_check
          %p237 = pneg %p88
        $region18: #{_inverted_residual_impl.1} parent=11 // pred_check_branch
          %239 = sbr.rel (%p237) target = $region20
        $region19: #{_inverted_residual_impl.1} parent=11 // pred_region
          _
        $region20: #{_inverted_residual_impl.1} parent=11 // pred_fallthru
          _
        // Predicated region
        $region21: #{_inverted_residual_impl.1} parent=11 // pred_check
          %p240 = pneg %p109
        $region22: #{_inverted_residual_impl.1} parent=11 // pred_check_branch
          %242 = sbr.rel (%p240) target = $region24
        $region23: #{_inverted_residual_impl.1} parent=11 // pred_region
          _
        $region24: #{_inverted_residual_impl.1} parent=11 // pred_fallthru
          _
        // Predicated region
        $region25: #{_inverted_residual_impl.1} parent=11 // pred_check
          %p243 = pneg %p130
        $region26: #{_inverted_residual_impl.1} parent=11 // pred_check_branch
          %245 = sbr.rel (%p243) target = $region28
        $region27: #{_inverted_residual_impl.1} parent=11 // pred_region
          _
        $region28: #{_inverted_residual_impl.1} parent=11 // pred_fallthru
          _
        // Predicated region
        $region29: #{_inverted_residual_impl.1} parent=11 // pred_check
          %p246 = pneg %p151
        $region30: #{_inverted_residual_impl.1} parent=11 // pred_check_branch
          %248 = sbr.rel (%p246) target = $region32
        $region31: #{_inverted_residual_impl.1} parent=11 // pred_region
          _
        $region32: #{_inverted_residual_impl.1} parent=11 // pred_fallthru
          _
        // Predicated region
        $region33: #{_inverted_residual_impl.1} parent=11 // pred_check
          %p249 = pneg %p172
        $region34: #{_inverted_residual_impl.1} parent=11 // pred_check_branch
          %251 = sbr.rel (%p249) target = $region36
        $region35: #{_inverted_residual_impl.1} parent=11 // pred_region
          _
        $region36: #{_inverted_residual_impl.1} parent=11 // pred_fallthru
          _
        // Predicated region
        $region37: #{_inverted_residual_impl.1} parent=11 // pred_check
          %p252 = pneg %p193
        $region38: #{_inverted_residual_impl.1} parent=11 // pred_check_branch
          %254 = sbr.rel (%p252) target = $region40
        $region39: #{_inverted_residual_impl.1} parent=11 // pred_region
          _
        $region40: #{_inverted_residual_impl.1} parent=11 // pred_fallthru
          _
      $region12: #{_inverted_residual_impl.1} parent=5 // pred_fallthru
        _
      %p255 = scmp.lt.s32.totalorder %s20, 2
      // Predicated region
      $region41: #{_inverted_residual_impl.1} parent=5 // pred_check
        %p256 = pneg %p255
      $region42: #{_inverted_residual_impl.1} parent=5 // pred_check_branch
        %258 = sbr.rel (%p256) target = $region44
      $region43: #{_inverted_residual_impl.1} parent=5 // pred_region
        // Predicated region
        $region45: #{_inverted_residual_impl.1} parent=43 // pred_check
          %p259 = pneg %p40
        $region46: #{_inverted_residual_impl.1} parent=43 // pred_check_branch
          %261 = sbr.rel (%p259) target = $region48
        $region47: #{_inverted_residual_impl.1} parent=43 // pred_region
          %s262 = sand.u32 %s30, 1
          %s263 = scalar_lea.sflag [#allocation3], %s262
          %s264 = sand.u32 %s30, 1
          %s265 = smul.addr %s264, 16
          %s266 = scalar_lea.vmem [#allocation2], %s265
          %s267 = smul.u32 2, %s20
          %s269 = ssub.s32 256, 256
          %270 = vsyncadd %s263, %s269
          %s271 = smul.addr %s267, 128
          %s272 = scalar_lea.hbm %s0, %s271
          %s274 = sshll.u32 %s266, 4
          %s275 = int_to_ptr.vmem [resolvable:$true] %s274
          %277 = dma.hbm_to_vmem [thread:$0]  %s272, 256, %s275, %s263
        $region48: #{_inverted_residual_impl.1} parent=43 // pred_fallthru
          _
      $region44: #{_inverted_residual_impl.1} parent=5 // pred_fallthru
        _
      %p278 = scmp.le.s32.totalorder 1, %s20
      %p279 = scmp.lt.s32.totalorder %s20, 3
      %p280 = pnand %p278, %p279
      %p281 = pneg %p280
      // Predicated region
      $region49: #{_inverted_residual_impl.1} parent=5 // pred_check
        _
      $region50: #{_inverted_residual_impl.1} parent=5 // pred_check_branch
        %283 = sbr.rel (%p280) target = $region52
      $region51: #{_inverted_residual_impl.1} parent=5 // pred_region
        %s284 = ssub.s32 %s20, 1
        %s285 = sand.u32 %s33, 1
        %s286 = scalar_lea.sflag [#allocation3], %s285
        %s287 = sand.u32 %s33, 1
        %s288 = smul.addr %s287, 16
        %s289 = scalar_lea.vmem [#allocation2], %s288
        // Predicated region
        $region53: #{_inverted_residual_impl.1} parent=51 // pred_check
          %p290 = pneg %p46
        $region54: #{_inverted_residual_impl.1} parent=51 // pred_check_branch
          %292 = sbr.rel (%p290) target = $region56
        $region55: #{_inverted_residual_impl.1} parent=51 // pred_region
          %293 = dma.done %s286, 256
        $region56: #{_inverted_residual_impl.1} parent=51 // pred_fallthru
          _
        %s294 = sand.u32 %s33, 1
        %s295 = scalar_lea.sflag [#allocation3], %s294
        %s296 = sand.u32 %s33, 1
        %s297 = smul.addr %s296, 16
        %s298 = scalar_lea.vmem [#allocation2], %s297
        %p299 = pneg %p46
        %p300 = pneg %p43
        %p301 = pneg %p67
        %p302 = pneg %p64
        %p303 = pneg %p88
        %p304 = pneg %p85
        %p305 = pneg %p109
        %p306 = pneg %p106
        %p307 = pneg %p130
        %p308 = pneg %p127
        %p309 = pneg %p151
        %p310 = pneg %p148
        %p311 = pneg %p172
        %p312 = pneg %p169
        %p313 = pneg %p193
        %p314 = pneg %p190
        %p315 = pneg %p219
        %p316 = pneg %p216
        %s317 = sand.u32 %s206, 1
        %s318 = scalar_lea.sflag [#allocation4], %s317
        %s319 = sand.u32 %s206, 1
        %s320 = smul.addr %s319, 16
        %s321 = scalar_lea.vmem [#allocation5], %s320
        %s322 = smul.u32 2, %s25
        %s323 = smul.u32 2, %s25
        %v324 = vld [vmem:[%s289] sm:$0xff]
        %v325 = vld [vmem:[%s289 + $0x8] sm:$0xff]
        %v326 = vld [vmem:[%s2] sm:$0xff]
        %v327 = vld [vmem:[%s2 + $0x8] sm:$0xff]
        %v328 = vld [vmem:[%s2 + $0x10] sm:$0xff]
        %v329 = vld [vmem:[%s3] sm:$0xff]
        %v330 = vld [vmem:[%s3 + $0x8] sm:$0xff]
        %v331 = vld [vmem:[%s3 + $0x10] sm:$0xff]
        %333 = vset.pattern.permute.xlu0 0
        %334 = vperm.xlu0 %333, %v329
        %v335 = vpop.permute.xlu0 %334
        %338 = vset.pattern.permute.xlu0 0
        %339 = vperm.xlu0 %338, %v330
        %v340 = vpop.permute.xlu0 %339
        %343 = vset.pattern.permute.xlu0 0
        %344 = vperm.xlu0 %343, %v331
        %v345 = vpop.permute.xlu0 %344
        %vm347 = vcmask 64512
        %v349 = vsel %vm347, %v326, 0
        %v352 = vsel %vm347, %v327, 0
        %v355 = vsel %vm347, %v328, 0
        %357 = vmatprep.subr.mxu0 0.0
        %358 = vmatpush1.msra.mxu0 0.0
        %359 = vmatprep.subr.mxu0 0.0
        %360 = vmatpush1.msra.mxu0 0.0
        %361 = vmatprep.subr.mxu0 0.0
        %362 = vmatpush1.msra.mxu0 0.0
        %363 = vmatprep.subr.mxu0 0.0
        %364 = vmatpush1.msra.mxu0 0.0
        %365 = vmatprep.subr.mxu0 0.0
        %366 = vmatpush1.msra.mxu0 0.0
        %367 = vmatprep.subr.mxu0 0.0
        %368 = vmatpush1.msra.mxu0 0.0
        %369 = vmatprep.subr.mxu0 0.0
        %370 = vmatpush1.msra.mxu0 0.0
        %371 = vmatprep.subr.mxu0 0.0
        %372 = vmatpush1.msra.mxu0 0.0
        %373 = vmatprep.subr.mxu0 0.0
        %374 = vmatpush1.msra.mxu0 0.0
        %375 = vmatprep.subr.mxu0 0.0
        %376 = vmatpush1.msra.mxu0 0.0
        %377 = vmatprep.subr.mxu0 0.0
        %378 = vmatpush1.msra.mxu0 0.0
        %379 = vmatprep.subr.mxu0 0.0
        %380 = vmatpush1.msra.mxu0 0.0
        %381 = vmatprep.subr.mxu0 0.0
        %382 = vmatpush1.msra.mxu0 0.0
        %383 = vmatprep.subr.mxu0 0.0
        %384 = vmatpush1.msra.mxu0 0.0
        %385 = vmatprep.subr.mxu0 0.0
        %386 = vmatpush1.msra.mxu0 0.0
        %387 = vmatprep.subr.mxu0 %v325
        %388 = vmatpush1.msra.mxu0 %v324
        %389 = vmatprep.subr.mxu0 0.0
        %390 = vmatpush2.msra.mxu0 0.0
        %391 = vmatprep.subr.mxu0 0.0
        %392 = vmatpush2.msra.mxu0 0.0
        %393 = vmatprep.subr.mxu0 0.0
        %394 = vmatpush2.msra.mxu0 0.0
        %395 = vmatprep.subr.mxu0 0.0
        %396 = vmatpush2.msra.mxu0 0.0
        %397 = vmatprep.subr.mxu0 0.0
        %398 = vmatpush2.msra.mxu0 0.0
        %399 = vmatprep.subr.mxu0 0.0
        %400 = vmatpush2.msra.mxu0 0.0
        %401 = vmatprep.subr.mxu0 0.0
        %402 = vmatpush2.msra.mxu0 0.0
        %403 = vmatprep.subr.mxu0 0.0
        %404 = vmatpush2.msra.mxu0 0.0
        %405 = vmatprep.subr.mxu0 0.0
        %406 = vmatpush2.msra.mxu0 0.0
        %407 = vmatprep.subr.mxu0 0.0
        %408 = vmatpush2.msra.mxu0 0.0
        %409 = vmatprep.subr.mxu0 0.0
        %410 = vmatpush2.msra.mxu0 0.0
        %411 = vmatprep.subr.mxu0 0.0
        %412 = vmatpush2.msra.mxu0 0.0
        %413 = vmatprep.subr.mxu0 0.0
        %414 = vmatpush2.msra.mxu0 0.0
        %415 = vmatprep.subr.mxu0 0.0
        %416 = vmatpush2.msra.mxu0 0.0
        %417 = vmatprep.subr.mxu0 0.0
        %418 = vmatpush2.msra.mxu0 0.0
        %419 = vmatprep.subr.mxu0 0.0
        %420 = vmatpush2.msra.mxu0 0.0
        %421 = vmatprep.mubr.f32.mxu0 0.0
        %422 = vmatmul.mubr.f32.gmra.mxu0 %v349
        %v423 = vpop.f32.mrf.mxu0
        %v424 = vadd.f32 %v335, %v423
        %v425 = vpop.f32.mrf.mxu0
        %v426 = vadd.f32 %v335, %v425
        %427 = vmatprep.mubr.f32.mxu0 0.0
        %428 = vmatmul.mubr.f32.gmra.mxu0 %v352
        %v429 = vpop.f32.mrf.mxu0
        %v430 = vadd.f32 %v340, %v429
        %v431 = vpop.f32.mrf.mxu0
        %v432 = vadd.f32 %v340, %v431
        %433 = vmatprep.mubr.f32.mxu0 0.0
        %434 = vmatmul.mubr.f32.gmra.mxu0 %v355
        %v435 = vpop.f32.mrf.mxu0
        %v436 = vadd.f32 %v345, %v435
        %v437 = vpop.f32.mrf.mxu0
        %v438 = vadd.f32 %v345, %v437
        %439 = vdwg.mxu0
        %v440 = vmax.f32 %v424, 0.0
        %v441 = vmax.f32 %v426, 0.0
        %v442 = vmax.f32 %v430, 0.0
        %v443 = vmax.f32 %v432, 0.0
        %v444 = vmax.f32 %v436, 0.0
        %v445 = vmax.f32 %v438, 0.0
        %v446 = vmin.f32 %v440, 6.0
        %v447 = vmin.f32 %v441, 6.0
        %v448 = vmin.f32 %v442, 6.0
        %v449 = vmin.f32 %v443, 6.0
        %v450 = vmin.f32 %v444, 6.0
        %v451 = vmin.f32 %v445, 6.0
        %v452 = vld [vmem:[%s1] sm:$0xff]
        %v453 = vld [vmem:[%s1 + $0x8] sm:$0xff]
        %v454 = vld [vmem:[%s1 + $0x10] sm:$0x1]
        %v455 = vld [vmem:[%s1 + $0x18] sm:$0x1]
        %v456 = vld [vmem:[%s4] sm:$0xff]
        %v457 = vld [vmem:[%s4 + $0x8] sm:$0xff]
        %v458 = vld [vmem:[%s4 + $0x10] sm:$0xff]
        %459 = vrot.lane.b32.xlu0 %v446, 17
        %v460 = vpop.permute.xlu0 %459
        %461 = vrot.lane.b32.xlu0 %v448, 17
        %v462 = vpop.permute.xlu0 %461
        %463 = vrot.lane.b32.xlu0 %v450, 17
        %v464 = vpop.permute.xlu0 %463
        %465 = vrot.lane.b32.xlu0 %v447, 17
        %v466 = vpop.permute.xlu0 %465
        %467 = vrot.lane.b32.xlu0 %v449, 17
        %v468 = vpop.permute.xlu0 %467
        %469 = vrot.lane.b32.xlu0 %v451, 17
        %v470 = vpop.permute.xlu0 %469
        %v471 = vlaneseq
        %v472 = vand.u32 %v471, 127
        %vm473 = vcmp.lt.s32.totalorder %v472, 17
        %v474 = vsel %vm473, %v460, %v466
        %v475 = vsel %vm473, %v462, %v468
        %v476 = vsel %vm473, %v464, %v470
        %v477 = vsel %vm473, %v466, %v460
        %v478 = vsel %vm473, %v468, %v462
        %v479 = vsel %vm473, %v470, %v464
        %v480 = vlaneseq
        %v481 = vshrl.u32 %v480, 7
        %v482 = vsub.s32 0, %v481
        %v483 = vrot.slane %v452, %v482
        %v484 = vlaneseq
        %v485 = vshrl.u32 %v484, 7
        %v486 = vsub.s32 0, %v485
        %v487 = vrot.slane %v453, %v486
        %v488 = vmul.f32 %v477, %v483
        %v489 = vmul.f32 %v474, %v487
        %v490 = vmul.f32 %v478, %v483
        %v491 = vmul.f32 %v475, %v487
        %v492 = vmul.f32 %v479, %v483
        %v493 = vmul.f32 %v476, %v487
        %495 = vset.pattern.permute.xlu0 0
        %496 = vperm.xlu0 %495, %v456
        %v497 = vpop.permute.xlu0 %496
        %500 = vset.pattern.permute.xlu0 0
        %501 = vperm.xlu0 %500, %v457
        %v502 = vpop.permute.xlu0 %501
        %505 = vset.pattern.permute.xlu0 0
        %506 = vperm.xlu0 %505, %v458
        %v507 = vpop.permute.xlu0 %506
        %v509 = vmul.f32 %v488, %v497
        %v510 = vmul.f32 %v489, %v497
        %v511 = vmul.f32 %v490, %v502
        %v512 = vmul.f32 %v491, %v502
        %v513 = vmul.f32 %v492, %v507
        %v514 = vmul.f32 %v493, %v507
        %v515 = vadd.f32 %v509, 0.0
        %v516 = vadd.f32 %v510, 0.0
        %v517 = vadd.f32 %v511, 0.0
        %v518 = vadd.f32 %v512, 0.0
        %v519 = vadd.f32 %v513, 0.0
        %v520 = vadd.f32 %v514, 0.0
        %521 = vrot.lane.b32.xlu0 %v446, 16
        %v522 = vpop.permute.xlu0 %521
        %523 = vrot.lane.b32.xlu0 %v448, 16
        %v524 = vpop.permute.xlu0 %523
        %525 = vrot.lane.b32.xlu0 %v450, 16
        %v526 = vpop.permute.xlu0 %525
        %527 = vrot.lane.b32.xlu0 %v447, 16
        %v528 = vpop.permute.xlu0 %527
        %529 = vrot.lane.b32.xlu0 %v449, 16
        %v530 = vpop.permute.xlu0 %529
        %531 = vrot.lane.b32.xlu0 %v451, 16
        %v532 = vpop.permute.xlu0 %531
        %vm533 = vcmp.lt.s32.totalorder %v472, 16
        %v534 = vsel %vm533, %v522, %v528
        %v535 = vsel %vm533, %v524, %v530
        %v536 = vsel %vm533, %v526, %v532
        %v537 = vsel %vm533, %v528, %v522
        %v538 = vsel %vm533, %v530, %v524
        %v539 = vsel %vm533, %v532, %v526
        %v540 = vlaneseq
        %v541 = vshrl.u32 %v540, 7
        %v542 = vsub.s32 1, %v541
        %v543 = vrot.slane %v452, %v542
        %v544 = vlaneseq
        %v545 = vshrl.u32 %v544, 7
        %v546 = vsub.s32 1, %v545
        %v547 = vrot.slane %v453, %v546
        %v548 = vmul.f32 %v537, %v543
        %v549 = vmul.f32 %v534, %v547
        %v550 = vmul.f32 %v538, %v543
        %v551 = vmul.f32 %v535, %v547
        %v552 = vmul.f32 %v539, %v543
        %v553 = vmul.f32 %v536, %v547
        %554 = vset.pattern.permute.xlu0 1
        %555 = vperm.xlu0 %554, %v456
        %v556 = vpop.permute.xlu0 %555
        %558 = vset.pattern.permute.xlu0 1
        %559 = vperm.xlu0 %558, %v457
        %v560 = vpop.permute.xlu0 %559
        %562 = vset.pattern.permute.xlu0 1
        %563 = vperm.xlu0 %562, %v458
        %v564 = vpop.permute.xlu0 %563
        %v566 = vmul.f32 %v548, %v556
        %v567 = vmul.f32 %v549, %v556
        %v568 = vmul.f32 %v550, %v560
        %v569 = vmul.f32 %v551, %v560
        %v570 = vmul.f32 %v552, %v564
        %v571 = vmul.f32 %v553, %v564
        %v572 = vadd.f32 %v515, %v566
        %v573 = vadd.f32 %v516, %v567
        %v574 = vadd.f32 %v517, %v568
        %v575 = vadd.f32 %v518, %v569
        %v576 = vadd.f32 %v519, %v570
        %v577 = vadd.f32 %v520, %v571
        %578 = vrot.lane.b32.xlu0 %v446, 15
        %v579 = vpop.permute.xlu0 %578
        %580 = vrot.lane.b32.xlu0 %v448, 15
        %v581 = vpop.permute.xlu0 %580
        %582 = vrot.lane.b32.xlu0 %v450, 15
        %v583 = vpop.permute.xlu0 %582
        %584 = vrot.lane.b32.xlu0 %v447, 15
        %v585 = vpop.permute.xlu0 %584
        %586 = vrot.lane.b32.xlu0 %v449, 15
        %v587 = vpop.permute.xlu0 %586
        %588 = vrot.lane.b32.xlu0 %v451, 15
        %v589 = vpop.permute.xlu0 %588
        %vm590 = vcmp.lt.s32.totalorder %v472, 15
        %v591 = vsel %vm590, %v579, %v585
        %v592 = vsel %vm590, %v581, %v587
        %v593 = vsel %vm590, %v583, %v589
        %v594 = vsel %vm590, %v585, %v579
        %v595 = vsel %vm590, %v587, %v581
        %v596 = vsel %vm590, %v589, %v583
        %v597 = vlaneseq
        %v598 = vshrl.u32 %v597, 7
        %v599 = vsub.s32 2, %v598
        %v600 = vrot.slane %v452, %v599
        %v601 = vlaneseq
        %v602 = vshrl.u32 %v601, 7
        %v603 = vsub.s32 2, %v602
        %v604 = vrot.slane %v453, %v603
        %v605 = vmul.f32 %v594, %v600
        %v606 = vmul.f32 %v591, %v604
        %v607 = vmul.f32 %v595, %v600
        %v608 = vmul.f32 %v592, %v604
        %v609 = vmul.f32 %v596, %v600
        %v610 = vmul.f32 %v593, %v604
        %611 = vset.pattern.permute.xlu0 2
        %612 = vperm.xlu0 %611, %v456
        %v613 = vpop.permute.xlu0 %612
        %615 = vset.pattern.permute.xlu0 2
        %616 = vperm.xlu0 %615, %v457
        %v617 = vpop.permute.xlu0 %616
        %619 = vset.pattern.permute.xlu0 2
        %620 = vperm.xlu0 %619, %v458
        %v621 = vpop.permute.xlu0 %620
        %v623 = vmul.f32 %v605, %v613
        %v624 = vmul.f32 %v606, %v613
        %v625 = vmul.f32 %v607, %v617
        %v626 = vmul.f32 %v608, %v617
        %v627 = vmul.f32 %v609, %v621
        %v628 = vmul.f32 %v610, %v621
        %v629 = vadd.f32 %v572, %v623
        %v630 = vadd.f32 %v573, %v624
        %v631 = vadd.f32 %v574, %v625
        %v632 = vadd.f32 %v575, %v626
        %v633 = vadd.f32 %v576, %v627
        %v634 = vadd.f32 %v577, %v628
        %635 = vrot.lane.b32.xlu0 %v446, 1
        %v636 = vpop.permute.xlu0 %635
        %637 = vrot.lane.b32.xlu0 %v448, 1
        %v638 = vpop.permute.xlu0 %637
        %639 = vrot.lane.b32.xlu0 %v450, 1
        %v640 = vpop.permute.xlu0 %639
        %641 = vrot.lane.b32.xlu0 %v447, 1
        %v642 = vpop.permute.xlu0 %641
        %643 = vrot.lane.b32.xlu0 %v449, 1
        %v644 = vpop.permute.xlu0 %643
        %645 = vrot.lane.b32.xlu0 %v451, 1
        %v646 = vpop.permute.xlu0 %645
        %vm647 = vcmp.lt.s32.totalorder %v472, 1
        %v648 = vsel %vm647, %v636, %v642
        %v649 = vsel %vm647, %v638, %v644
        %v650 = vsel %vm647, %v640, %v646
        %v651 = vsel %vm647, %v642, %v636
        %v652 = vsel %vm647, %v644, %v638
        %v653 = vsel %vm647, %v646, %v640
        %v654 = vlaneseq
        %v655 = vshrl.u32 %v654, 7
        %v656 = vsub.s32 3, %v655
        %v657 = vrot.slane %v452, %v656
        %v658 = vlaneseq
        %v659 = vshrl.u32 %v658, 7
        %v660 = vsub.s32 3, %v659
        %v661 = vrot.slane %v453, %v660
        %v662 = vmul.f32 %v651, %v657
        %v663 = vmul.f32 %v648, %v661
        %v664 = vmul.f32 %v652, %v657
        %v665 = vmul.f32 %v649, %v661
        %v666 = vmul.f32 %v653, %v657
        %v667 = vmul.f32 %v650, %v661
        %668 = vset.pattern.permute.xlu0 3
        %669 = vperm.xlu0 %668, %v456
        %v670 = vpop.permute.xlu0 %669
        %672 = vset.pattern.permute.xlu0 3
        %673 = vperm.xlu0 %672, %v457
        %v674 = vpop.permute.xlu0 %673
        %676 = vset.pattern.permute.xlu0 3
        %677 = vperm.xlu0 %676, %v458
        %v678 = vpop.permute.xlu0 %677
        %v680 = vmul.f32 %v662, %v670
        %v681 = vmul.f32 %v663, %v670
        %v682 = vmul.f32 %v664, %v674
        %v683 = vmul.f32 %v665, %v674
        %v684 = vmul.f32 %v666, %v678
        %v685 = vmul.f32 %v667, %v678
        %v686 = vadd.f32 %v629, %v680
        %v687 = vadd.f32 %v630, %v681
        %v688 = vadd.f32 %v631, %v682
        %v689 = vadd.f32 %v632, %v683
        %v690 = vadd.f32 %v633, %v684
        %v691 = vadd.f32 %v634, %v685
        %692 = vset.pattern.permute.xlu0 4
        %693 = vperm.xlu0 %692, %v456
        %v694 = vpop.permute.xlu0 %693
        %696 = vset.pattern.permute.xlu0 4
        %697 = vperm.xlu0 %696, %v457
        %v698 = vpop.permute.xlu0 %697
        %700 = vset.pattern.permute.xlu0 4
        %701 = vperm.xlu0 %700, %v458
        %v702 = vpop.permute.xlu0 %701
        %v704 = vmul.f32 %v446, %v694
        %v705 = vmul.f32 %v447, %v694
        %v706 = vmul.f32 %v448, %v698
        %v707 = vmul.f32 %v449, %v698
        %v708 = vmul.f32 %v450, %v702
        %v709 = vmul.f32 %v451, %v702
        %v710 = vadd.f32 %v686, %v704
        %v711 = vadd.f32 %v687, %v705
        %v712 = vadd.f32 %v688, %v706
        %v713 = vadd.f32 %v689, %v707
        %v714 = vadd.f32 %v690, %v708
        %v715 = vadd.f32 %v691, %v709
        %716 = vrot.lane.b32.xlu0 %v446, 127
        %v717 = vpop.permute.xlu0 %716
        %718 = vrot.lane.b32.xlu0 %v448, 127
        %v719 = vpop.permute.xlu0 %718
        %720 = vrot.lane.b32.xlu0 %v450, 127
        %v721 = vpop.permute.xlu0 %720
        %722 = vrot.lane.b32.xlu0 %v447, 127
        %v723 = vpop.permute.xlu0 %722
        %724 = vrot.lane.b32.xlu0 %v449, 127
        %v725 = vpop.permute.xlu0 %724
        %726 = vrot.lane.b32.xlu0 %v451, 127
        %v727 = vpop.permute.xlu0 %726
        %vm728 = vcmp.lt.s32.totalorder %v472, 127
        %v729 = vsel %vm728, %v717, %v723
        %v730 = vsel %vm728, %v719, %v725
        %v731 = vsel %vm728, %v721, %v727
        %v732 = vsel %vm728, %v723, %v717
        %v733 = vsel %vm728, %v725, %v719
        %v734 = vsel %vm728, %v727, %v721
        %v735 = vlaneseq
        %v736 = vshrl.u32 %v735, 7
        %v737 = vsub.s32 5, %v736
        %v738 = vrot.slane %v452, %v737
        %v739 = vlaneseq
        %v740 = vshrl.u32 %v739, 7
        %v741 = vsub.s32 5, %v740
        %v742 = vrot.slane %v453, %v741
        %v743 = vmul.f32 %v729, %v738
        %v744 = vmul.f32 %v732, %v742
        %v745 = vmul.f32 %v730, %v738
        %v746 = vmul.f32 %v733, %v742
        %v747 = vmul.f32 %v731, %v738
        %v748 = vmul.f32 %v734, %v742
        %749 = vset.pattern.permute.xlu0 5
        %750 = vperm.xlu0 %749, %v456
        %v751 = vpop.permute.xlu0 %750
        %753 = vset.pattern.permute.xlu0 5
        %754 = vperm.xlu0 %753, %v457
        %v755 = vpop.permute.xlu0 %754
        %757 = vset.pattern.permute.xlu0 5
        %758 = vperm.xlu0 %757, %v458
        %v759 = vpop.permute.xlu0 %758
        %v761 = vmul.f32 %v743, %v751
        %v762 = vmul.f32 %v744, %v751
        %v763 = vmul.f32 %v745, %v755
        %v764 = vmul.f32 %v746, %v755
        %v765 = vmul.f32 %v747, %v759
        %v766 = vmul.f32 %v748, %v759
        %v767 = vadd.f32 %v710, %v761
        %v768 = vadd.f32 %v711, %v762
        %v769 = vadd.f32 %v712, %v763
        %v770 = vadd.f32 %v713, %v764
        %v771 = vadd.f32 %v714, %v765
        %v772 = vadd.f32 %v715, %v766
        %773 = vrot.lane.b32.xlu0 %v446, 113
        %v774 = vpop.permute.xlu0 %773
        %775 = vrot.lane.b32.xlu0 %v448, 113
        %v776 = vpop.permute.xlu0 %775
        %777 = vrot.lane.b32.xlu0 %v450, 113
        %v778 = vpop.permute.xlu0 %777
        %779 = vrot.lane.b32.xlu0 %v447, 113
        %v780 = vpop.permute.xlu0 %779
        %781 = vrot.lane.b32.xlu0 %v449, 113
        %v782 = vpop.permute.xlu0 %781
        %783 = vrot.lane.b32.xlu0 %v451, 113
        %v784 = vpop.permute.xlu0 %783
        %vm785 = vcmp.lt.s32.totalorder %v472, 113
        %v786 = vsel %vm785, %v774, %v780
        %v787 = vsel %vm785, %v776, %v782
        %v788 = vsel %vm785, %v778, %v784
        %v789 = vsel %vm785, %v780, %v774
        %v790 = vsel %vm785, %v782, %v776
        %v791 = vsel %vm785, %v784, %v778
        %v792 = vlaneseq
        %v793 = vshrl.u32 %v792, 7
        %v794 = vsub.s32 6, %v793
        %v795 = vrot.slane %v452, %v794
        %v796 = vlaneseq
        %v797 = vshrl.u32 %v796, 7
        %v798 = vsub.s32 6, %v797
        %v799 = vrot.slane %v453, %v798
        %v800 = vmul.f32 %v786, %v795
        %v801 = vmul.f32 %v789, %v799
        %v802 = vmul.f32 %v787, %v795
        %v803 = vmul.f32 %v790, %v799
        %v804 = vmul.f32 %v788, %v795
        %v805 = vmul.f32 %v791, %v799
        %806 = vset.pattern.permute.xlu0 6
        %807 = vperm.xlu0 %806, %v456
        %v808 = vpop.permute.xlu0 %807
        %810 = vset.pattern.permute.xlu0 6
        %811 = vperm.xlu0 %810, %v457
        %v812 = vpop.permute.xlu0 %811
        %814 = vset.pattern.permute.xlu0 6
        %815 = vperm.xlu0 %814, %v458
        %v816 = vpop.permute.xlu0 %815
        %v818 = vmul.f32 %v800, %v808
        %v819 = vmul.f32 %v801, %v808
        %v820 = vmul.f32 %v802, %v812
        %v821 = vmul.f32 %v803, %v812
        %v822 = vmul.f32 %v804, %v816
        %v823 = vmul.f32 %v805, %v816
        %v824 = vadd.f32 %v767, %v818
        %v825 = vadd.f32 %v768, %v819
        %v826 = vadd.f32 %v769, %v820
        %v827 = vadd.f32 %v770, %v821
        %v828 = vadd.f32 %v771, %v822
        %v829 = vadd.f32 %v772, %v823
        %830 = vrot.lane.b32.xlu0 %v446, 112
        %v831 = vpop.permute.xlu0 %830
        %832 = vrot.lane.b32.xlu0 %v448, 112
        %v833 = vpop.permute.xlu0 %832
        %834 = vrot.lane.b32.xlu0 %v450, 112
        %v835 = vpop.permute.xlu0 %834
        %836 = vrot.lane.b32.xlu0 %v447, 112
        %v837 = vpop.permute.xlu0 %836
        %838 = vrot.lane.b32.xlu0 %v449, 112
        %v839 = vpop.permute.xlu0 %838
        %840 = vrot.lane.b32.xlu0 %v451, 112
        %v841 = vpop.permute.xlu0 %840
        %vm842 = vcmp.lt.s32.totalorder %v472, 112
        %v843 = vsel %vm842, %v831, %v837
        %v844 = vsel %vm842, %v833, %v839
        %v845 = vsel %vm842, %v835, %v841
        %v846 = vsel %vm842, %v837, %v831
        %v847 = vsel %vm842, %v839, %v833
        %v848 = vsel %vm842, %v841, %v835
        %v849 = vlaneseq
        %v850 = vshrl.u32 %v849, 7
        %v851 = vsub.s32 7, %v850
        %v852 = vrot.slane %v452, %v851
        %v853 = vlaneseq
        %v854 = vshrl.u32 %v853, 7
        %v855 = vsub.s32 7, %v854
        %v856 = vrot.slane %v453, %v855
        %v857 = vmul.f32 %v843, %v852
        %v858 = vmul.f32 %v846, %v856
        %v859 = vmul.f32 %v844, %v852
        %v860 = vmul.f32 %v847, %v856
        %v861 = vmul.f32 %v845, %v852
        %v862 = vmul.f32 %v848, %v856
        %863 = vset.pattern.permute.xlu0 7
        %864 = vperm.xlu0 %863, %v456
        %v865 = vpop.permute.xlu0 %864
        %867 = vset.pattern.permute.xlu0 7
        %868 = vperm.xlu0 %867, %v457
        %v869 = vpop.permute.xlu0 %868
        %871 = vset.pattern.permute.xlu0 7
        %872 = vperm.xlu0 %871, %v458
        %v873 = vpop.permute.xlu0 %872
        %v875 = vmul.f32 %v857, %v865
        %v876 = vmul.f32 %v858, %v865
        %v877 = vmul.f32 %v859, %v869
        %v878 = vmul.f32 %v860, %v869
        %v879 = vmul.f32 %v861, %v873
        %v880 = vmul.f32 %v862, %v873
        %v881 = vadd.f32 %v824, %v875
        %v882 = vadd.f32 %v825, %v876
        %v883 = vadd.f32 %v826, %v877
        %v884 = vadd.f32 %v827, %v878
        %v885 = vadd.f32 %v828, %v879
        %v886 = vadd.f32 %v829, %v880
        %887 = vrot.lane.b32.xlu0 %v446, 111
        %v888 = vpop.permute.xlu0 %887
        %889 = vrot.lane.b32.xlu0 %v448, 111
        %v890 = vpop.permute.xlu0 %889
        %891 = vrot.lane.b32.xlu0 %v450, 111
        %v892 = vpop.permute.xlu0 %891
        %893 = vrot.lane.b32.xlu0 %v447, 111
        %v894 = vpop.permute.xlu0 %893
        %895 = vrot.lane.b32.xlu0 %v449, 111
        %v896 = vpop.permute.xlu0 %895
        %897 = vrot.lane.b32.xlu0 %v451, 111
        %v898 = vpop.permute.xlu0 %897
        %vm899 = vcmp.lt.s32.totalorder %v472, 111
        %v900 = vsel %vm899, %v888, %v894
        %v901 = vsel %vm899, %v890, %v896
        %v902 = vsel %vm899, %v892, %v898
        %v903 = vsel %vm899, %v894, %v888
        %v904 = vsel %vm899, %v896, %v890
        %v905 = vsel %vm899, %v898, %v892
        %v906 = vlaneseq
        %v907 = vshrl.u32 %v906, 7
        %v908 = vsub.s32 0, %v907
        %v909 = vrot.slane %v454, %v908
        %v910 = vlaneseq
        %v911 = vshrl.u32 %v910, 7
        %v912 = vsub.s32 0, %v911
        %v913 = vrot.slane %v455, %v912
        %v914 = vmul.f32 %v900, %v909
        %v915 = vmul.f32 %v903, %v913
        %v916 = vmul.f32 %v901, %v909
        %v917 = vmul.f32 %v904, %v913
        %v918 = vmul.f32 %v902, %v909
        %v919 = vmul.f32 %v905, %v913
        %920 = vset.pattern.permute.xlu0 8
        %921 = vperm.xlu0 %920, %v456
        %v922 = vpop.permute.xlu0 %921
        %924 = vset.pattern.permute.xlu0 8
        %925 = vperm.xlu0 %924, %v457
        %v926 = vpop.permute.xlu0 %925
        %928 = vset.pattern.permute.xlu0 8
        %929 = vperm.xlu0 %928, %v458
        %v930 = vpop.permute.xlu0 %929
        %v932 = vmul.f32 %v914, %v922
        %v933 = vmul.f32 %v915, %v922
        %v934 = vmul.f32 %v916, %v926
        %v935 = vmul.f32 %v917, %v926
        %v936 = vmul.f32 %v918, %v930
        %v937 = vmul.f32 %v919, %v930
        %v938 = vadd.f32 %v881, %v932
        %v939 = vadd.f32 %v882, %v933
        %v940 = vadd.f32 %v883, %v934
        %v941 = vadd.f32 %v884, %v935
        %v942 = vadd.f32 %v885, %v936
        %v943 = vadd.f32 %v886, %v937
        %v944 = vld [vmem:[%s5] sm:$0xff]
        %v945 = vld [vmem:[%s5 + $0x8] sm:$0xff]
        %v946 = vld [vmem:[%s5 + $0x10] sm:$0xff]
        %948 = vset.pattern.permute.xlu0 0
        %949 = vperm.xlu0 %948, %v944
        %v950 = vpop.permute.xlu0 %949
        %953 = vset.pattern.permute.xlu0 0
        %954 = vperm.xlu0 %953, %v945
        %v955 = vpop.permute.xlu0 %954
        %958 = vset.pattern.permute.xlu0 0
        %959 = vperm.xlu0 %958, %v946
        %v960 = vpop.permute.xlu0 %959
        %v962 = vadd.f32 %v938, %v950
        %v963 = vadd.f32 %v939, %v950
        %v964 = vadd.f32 %v940, %v955
        %v965 = vadd.f32 %v941, %v955
        %v966 = vadd.f32 %v942, %v960
        %v967 = vadd.f32 %v943, %v960
        %v968 = vmax.f32 %v962, 0.0
        %v969 = vmax.f32 %v963, 0.0
        %v970 = vmax.f32 %v964, 0.0
        %v971 = vmax.f32 %v965, 0.0
        %v972 = vmax.f32 %v966, 0.0
        %v973 = vmax.f32 %v967, 0.0
        %v974 = vmin.f32 %v968, 6.0
        %v975 = vmin.f32 %v969, 6.0
        %v976 = vmin.f32 %v970, 6.0
        %v977 = vmin.f32 %v971, 6.0
        %v978 = vmin.f32 %v972, 6.0
        %v979 = vmin.f32 %v973, 6.0
        %v980 = vld [vmem:[%s6] sm:$0xff]
        %v981 = vld [vmem:[%s7] sm:$0xff]
        %983 = vset.pattern.permute.xlu0 0
        %984 = vperm.xlu0 %983, %v981
        %v985 = vpop.permute.xlu0 %984
        %vm987 = vcmask 195584
        %v989 = vsel %vm987, %v980, 0
        %991 = vmatprep.subr.mxu0 0.0
        %992 = vmatpush1.msra.mxu0 0.0
        %993 = vmatprep.subr.mxu0 0.0
        %994 = vmatpush1.msra.mxu0 0.0
        %995 = vmatprep.subr.mxu0 0.0
        %996 = vmatpush1.msra.mxu0 0.0
        %997 = vmatprep.subr.mxu0 0.0
        %998 = vmatpush1.msra.mxu0 0.0
        %999 = vmatprep.subr.mxu0 0.0
        %1000 = vmatpush1.msra.mxu0 0.0
        %1001 = vmatprep.subr.mxu0 0.0
        %1002 = vmatpush1.msra.mxu0 0.0
        %1003 = vmatprep.subr.mxu0 0.0
        %1004 = vmatpush1.msra.mxu0 0.0
        %1005 = vmatprep.subr.mxu0 0.0
        %1006 = vmatpush1.msra.mxu0 0.0
        %1007 = vmatprep.subr.mxu0 0.0
        %1008 = vmatpush1.msra.mxu0 0.0
        %1009 = vmatprep.subr.mxu0 0.0
        %1010 = vmatpush1.msra.mxu0 0.0
        %1011 = vmatprep.subr.mxu0 0.0
        %1012 = vmatpush1.msra.mxu0 0.0
        %1013 = vmatprep.subr.mxu0 0.0
        %1014 = vmatpush1.msra.mxu0 0.0
        %1015 = vmatprep.subr.mxu0 0.0
        %1016 = vmatpush1.msra.mxu0 0.0
        %1017 = vmatprep.subr.mxu0 %v979
        %1018 = vmatpush1.msra.mxu0 %v978
        %1019 = vmatprep.subr.mxu0 %v977
        %1020 = vmatpush1.msra.mxu0 %v976
        %1021 = vmatprep.subr.mxu0 %v975
        %1022 = vmatpush1.msra.mxu0 %v974
        %1023 = vmatprep.subr.mxu0 0.0
        %1024 = vmatpush2.msra.mxu0 0.0
        %1025 = vmatprep.subr.mxu0 0.0
        %1026 = vmatpush2.msra.mxu0 0.0
        %1027 = vmatprep.subr.mxu0 0.0
        %1028 = vmatpush2.msra.mxu0 0.0
        %1029 = vmatprep.subr.mxu0 0.0
        %1030 = vmatpush2.msra.mxu0 0.0
        %1031 = vmatprep.subr.mxu0 0.0
        %1032 = vmatpush2.msra.mxu0 0.0
        %1033 = vmatprep.subr.mxu0 0.0
        %1034 = vmatpush2.msra.mxu0 0.0
        %1035 = vmatprep.subr.mxu0 0.0
        %1036 = vmatpush2.msra.mxu0 0.0
        %1037 = vmatprep.subr.mxu0 0.0
        %1038 = vmatpush2.msra.mxu0 0.0
        %1039 = vmatprep.subr.mxu0 0.0
        %1040 = vmatpush2.msra.mxu0 0.0
        %1041 = vmatprep.subr.mxu0 0.0
        %1042 = vmatpush2.msra.mxu0 0.0
        %1043 = vmatprep.subr.mxu0 0.0
        %1044 = vmatpush2.msra.mxu0 0.0
        %1045 = vmatprep.subr.mxu0 0.0
        %1046 = vmatpush2.msra.mxu0 0.0
        %1047 = vmatprep.subr.mxu0 0.0
        %1048 = vmatpush2.msra.mxu0 0.0
        %1049 = vmatprep.subr.mxu0 0.0
        %1050 = vmatpush2.msra.mxu0 0.0
        %1051 = vmatprep.subr.mxu0 0.0
        %1052 = vmatpush2.msra.mxu0 0.0
        %1053 = vmatprep.subr.mxu0 0.0
        %1054 = vmatpush2.msra.mxu0 0.0
        %1055 = vmatprep.mubr.f32.mxu0 0.0
        %1056 = vmatmul.mubr.f32.gmra.mxu0 %v989
        %v1057 = vpop.f32.mrf.mxu0
        %v1058 = vadd.f32 %v985, %v1057
        %v1059 = vpop.f32.mrf.mxu0
        %v1060 = vadd.f32 %v985, %v1059
        %1061 = vdwg.mxu0
        %v1062 = vadd.f32 %v1058, %v324
        %v1063 = vadd.f32 %v1060, %v325
        %1064 = vst [vmem:[%s321] sm:$0xff] %v1062
        %1065 = vst [vmem:[%s321 + $0x8] sm:$0xff] %v1063
        %s1066 = sand.u32 %s206, 1
        %s1067 = scalar_lea.sflag [#allocation4], %s1066
        %s1068 = sand.u32 %s206, 1
        %s1069 = smul.addr %s1068, 16
        %s1070 = scalar_lea.vmem [#allocation5], %s1069
        // Predicated region
        $region57: #{_inverted_residual_impl.1} parent=51 // pred_check
          %p1071 = pneg %p216
        $region58: #{_inverted_residual_impl.1} parent=51 // pred_check_branch
          %1073 = sbr.rel (%p1071) target = $region60
        $region59: #{_inverted_residual_impl.1} parent=51 // pred_region
          %s1074 = smul.u32 2, %s25
          %s1076 = ssub.s32 256, 256
          %1077 = vsyncadd %s1067, %s1076
          %s1078 = smul.addr %s1074, 128
          %s1079 = scalar_lea.hbm %s8, %s1078
          %s1081 = sshll.u32 %s1070, 4
          %s1082 = int_to_ptr.vmem [resolvable:$true] %s1081
          %1084 = dma.vmem_to_hbm [thread:$0]  %s1082, 256, %s1079, %s1067
        $region60: #{_inverted_residual_impl.1} parent=51 // pred_fallthru
          _
      $region52: #{_inverted_residual_impl.1} parent=5 // pred_fallthru
        _
      %p1085 = scmp.le.s32.totalorder 2, %s20
      // Predicated region
      $region61: #{_inverted_residual_impl.1} parent=5 // pred_check
        %p1086 = pneg %p1085
      $region62: #{_inverted_residual_impl.1} parent=5 // pred_check_branch
        %1088 = sbr.rel (%p1086) target = $region64
      $region63: #{_inverted_residual_impl.1} parent=5 // pred_region
        %s1089 = ssub.s32 %s20, 2
        // Predicated region
        $region65: #{_inverted_residual_impl.1} parent=63 // pred_check
          %p1090 = pneg %p222
        $region66: #{_inverted_residual_impl.1} parent=63 // pred_check_branch
          %1092 = sbr.rel (%p1090) target = $region68
        $region67: #{_inverted_residual_impl.1} parent=63 // pred_region
          %s1093 = sand.u32 %s207, 1
          %s1094 = scalar_lea.sflag [#allocation4], %s1093
          %s1095 = sand.u32 %s207, 1
          %s1096 = smul.addr %s1095, 16
          %s1097 = scalar_lea.vmem [#allocation5], %s1096
          %1098 = dma.done %s1094, 256
        $region68: #{_inverted_residual_impl.1} parent=63 // pred_fallthru
          _
      $region64: #{_inverted_residual_impl.1} parent=5 // pred_fallthru
        _
    $region6: #{_inverted_residual_impl.1} parent=1 // loop_footer
      %s24 = sadd.s32 1, %s20
    $region7: #{_inverted_residual_impl.1} parent=1 // loop_footer_branch
      %19 = sbr.rel target = $region3
    $region8: #{_inverted_residual_impl.1} parent=1 // loop_exit
      _
    %1099 = vsyncpa [#allocation3], 1
    %s1100 = scalar_lea.sflag [#allocation3], 1
    %1101 = vsyncpa %s1100, 1
    %1102 = vsyncpa [#allocation4], 1
    %s1103 = scalar_lea.sflag [#allocation4], 1
    %1104 = vsyncpa %s1103, 1

</llo_original>
